<compile_context>
chip_gen: v5e
topology: v5e:2x2
jax: 0.10.0
libtpu: 0.0.40
codegen_flags: <defaults>
</compile_context>

<pallas_src>
import jax
import jax.numpy as jnp
from jax.experimental import pallas as pl
from jax.experimental.pallas import tpu as pltpu


# ----------------------------------------------------------------------------
# Tiling helpers
# ----------------------------------------------------------------------------
def _largest_divisor_multiple(dim, unit, cap):
    """Largest multiple of `unit` that divides `dim` and is <= min(cap, dim)."""
    cap = min(cap, dim)
    best = unit
    t = unit
    while t <= cap:
        if dim % t == 0:
            best = t
        t += unit
    return best


def _vmem_limit_bytes():
    """Generation-aware scoped-VMEM limit (v7x has only 64 MiB per TC)."""
    cap = 128 * 1024 * 1024
    try:
        cap = int(pltpu.get_tpu_info().vmem_capacity_bytes)
    except Exception:
        pass
    # With <=~1 MiB blocks this is far more than needed; half of physical VMEM
    # leaves ample headroom for compiler-internal scratch on every generation.
    return max(16 * 1024 * 1024, min(48 * 1024 * 1024, cap // 2))


def _choose_tiles(b, n, hw, itemsize):
    """Pick block (tb, nj, thw).

    Constraints: nj is a divisor of n that is a multiple of 8 (or n itself);
    thw is a multiple-of-128 divisor of hw (or hw itself); tb is a divisor of
    b.  Every tile divides its axis exactly, so there are never partial blocks
    and no lane masks are needed in the kernel.  Target ~0.25-1 MiB per stream
    per block and >=8 grid steps so DMA overlaps compute and the parallel grid
    axes get several balanced blocks.
    """
    per_stream = b * n * hw * itemsize
    if 3 * per_stream <= 2 * 1024 * 1024:
        return b, n, hw                      # tiny problem: one block, one step

    target = max(256 * 1024, min(1024 * 1024, per_stream // 8))

    # Joint tile candidates: divisors of n that are multiples of 8, plus n.
    nj_cands = sorted({n} | {d for d in range(8, n, 8) if n % d == 0})
    nj_min = nj_cands[0]

    # Pixel (lane) axis: >=512 lanes for DMA efficiency, exact divisor of hw.
    if hw % 128 == 0:
        cap_thw = max(512, target // (itemsize * nj_min))
        thw = _largest_divisor_multiple(hw, 128, cap_thw)
    else:
        thw = hw                             # only legal tile is the full axis

    # Joint (sublane) axis: largest candidate that keeps the block near target.
    cols = max(1, target // (itemsize * thw))
    nj = nj_min
    for c in nj_cands:
        if c <= cols:
            nj = c

    # Batch axis: plain divisor of b filling the remaining budget.
    rows = max(1, target // (itemsize * thw * nj))
    tb = _largest_divisor_multiple(b, 1, rows)
    return tb, nj, thw


# ----------------------------------------------------------------------------
# Kernel: per-(sample, joint) partial sums, accumulated over the pixel axis
# ----------------------------------------------------------------------------
def _partials_kernel(sf_ref, kf_ref, gt_ref, ps_ref, hs_ref, pc_ref, hc_ref):
    hb = pl.program_id(2)                    # pixel (reduction) axis, innermost

    @pl.when(hb == 0)
    def _init():
        ps_ref[...] = jnp.zeros_like(ps_ref)
        hs_ref[...] = jnp.zeros_like(hs_ref)
        pc_ref[...] = jnp.zeros_like(pc_ref)
        hc_ref[...] = jnp.zeros_like(hc_ref)

    # Cast after the load so HBM traffic stays in the native dtype.
    sf = sf_ref[...].astype(jnp.float32)     # (TB, NJ, THW)
    gt = gt_ref[...].astype(jnp.float32)
    kf = kf_ref[...]                         # compared in native dtype (no cast)

    diff = sf - gt
    sq = diff * diff                         # MSE(reduction='none'); kw factored out

    gt_pos = gt > 0.01
    kf_le = kf <= 0.05

    zero = jnp.float32(0.0)
    sq_pos = jnp.where(gt_pos, sq, zero)     # all gt-positive pixels
    sq_hard = jnp.where(kf_le, sq_pos, zero)  # hard = gt_pos & (kf <= 0.05)
    pos_f = gt_pos.astype(jnp.float32)
    hard_f = jnp.where(kf_le, pos_f, zero)

    ps_ref[...] += jnp.sum(sq_pos, axis=-1)[None, None]   # (1,1,TB,NJ)
    hs_ref[...] += jnp.sum(sq_hard, axis=-1)[None, None]
    pc_ref[...] += jnp.sum(pos_f, axis=-1)[None, None]
    hc_ref[...] += jnp.sum(hard_f, axis=-1)[None, None]


# ----------------------------------------------------------------------------
# Wrapper
# ----------------------------------------------------------------------------
def joint_heatmap_supplement_loss(sf_output, kf_output, gt, keypoint_weight,
                                  use_keypoint_weight=True,
                                  divided_num_joints=True,
                                  hard_weight=1.5, easy_weight=1.0):
    b, n, h, w = sf_output.shape
    hw = h * w

    # Free reshapes only: keep native layout and dtype.
    sf = sf_output.reshape(b, n, hw)
    kf = kf_output.reshape(b, n, hw)
    g = gt.reshape(b, n, hw)

    itemsize = max(jnp.dtype(sf.dtype).itemsize,
                   jnp.dtype(kf.dtype).itemsize,
                   jnp.dtype(g.dtype).itemsize)
    tb, nj, thw = _choose_tiles(b, n, hw, itemsize)
    n_jb = -(-n // nj)        # == n // nj (nj divides n by construction)
    n_bb = b // tb
    n_hb = hw // thw

    out_sds = jax.ShapeDtypeStruct((n_jb, n_bb, tb, nj), jnp.float32)
    out_spec = pl.BlockSpec((1, 1, tb, nj), lambda jb, bb, hb: (jb, bb, 0, 0))
    in_spec = pl.BlockSpec((tb, nj, thw), lambda jb, bb, hb: (bb, jb, hb))

    ps, hs, pc, hc = pl.pallas_call(
        _partials_kernel,
        out_shape=(out_sds, out_sds, out_sds, out_sds),
        grid_spec=pltpu.PrefetchScalarGridSpec(
            num_scalar_prefetch=0,
            grid=(n_jb, n_bb, n_hb),
            in_specs=[in_spec, in_spec, in_spec],
            out_specs=(out_spec, out_spec, out_spec, out_spec),
        ),
        compiler_params=pltpu.CompilerParams(
            dimension_semantics=("parallel", "parallel", "arbitrary"),
            vmem_limit_bytes=_vmem_limit_bytes()),
    )(sf, kf, g)

    def unblock(x):           # (n_jb, n_bb, tb, nj) -> (b, n)
        return jnp.transpose(x, (1, 2, 0, 3)).reshape(b, n_jb * nj)[:, :n]

    ps = unblock(ps)
    hs = unblock(hs)
    pc = unblock(pc)
    hc = unblock(hc)
    es = ps - hs              # easy = gt_pos & not(kf <= 0.05)
    ec = pc - hc

    if use_keypoint_weight:
        # (sf*kw - gt*kw)^2 == kw^2 * (sf-gt)^2 ; apply on HW-reduced partials.
        w2 = jnp.square(keypoint_weight.astype(jnp.float32))   # (B, N)
        hs = hs * w2
        es = es * w2

    hard_loss = jnp.sum(hs, axis=0)          # (N,)
    easy_loss = jnp.sum(es, axis=0)
    hard_cnt = jnp.sum(hc, axis=0)
    easy_cnt = jnp.sum(ec, axis=0)
    loss = jnp.sum(hard_weight * hard_loss / (hard_cnt + 1.0)
                   + easy_weight * easy_loss / (easy_cnt + 1.0))
    if divided_num_joints:
        loss = loss / n
    return loss


# ----------------------------------------------------------------------------
# Pure-JAX reference (mirror of the PyTorch forward) for correctness checks
# ----------------------------------------------------------------------------
def _reference(sf, kf, gt, kw, use_keypoint_weight=True, divided_num_joints=True):
    b, n, h, w = sf.shape
    p = sf.reshape(b, n, -1).astype(jnp.float32)
    q = kf.reshape(b, n, -1).astype(jnp.float32)
    t = gt.reshape(b, n, -1).astype(jnp.float32)
    hard = ((t > 0.01) & (q <= 0.05)).astype(jnp.float32)
    easy = ((t > 0.01) & (q > 0.05)).astype(jnp.float32)
    if use_keypoint_weight:
        wgt = kw.astype(jnp.float32)[:, :, None]
        lm = (p * wgt - t * wgt) ** 2
    else:
        lm = (p - t) ** 2
    hard_loss = jnp.sum(lm * hard, axis=(0, 2)) * 1.5
    easy_loss = jnp.sum(lm * easy, axis=(0, 2)) * 1.0
    hard_cnt = jnp.sum(hard, axis=(0, 2))
    easy_cnt = jnp.sum(easy, axis=(0, 2))
    loss = jnp.sum(hard_loss / (hard_cnt + 1.0) + easy_loss / (easy_cnt + 1.0))
    if divided_num_joints:
        loss = loss / n
    return loss


if __name__ == "__main__":
    key = jax.random.PRNGKey(0)
    keys = jax.random.split(key, 8)

    # --- small shape (single-block fast path) ---
    B, N, H, W = 2, 4, 16, 16
    sf_output = jax.random.uniform(keys[0], (B, N, H, W), dtype=jnp.float32)
    kf_output = jax.random.uniform(keys[1], (B, N, H, W), dtype=jnp.float32)
    gt = jax.random.uniform(keys[2], (B, N, H, W), dtype=jnp.float32)
    keypoint_weight = jax.random.uniform(keys[3], (B, N), dtype=jnp.float32)

    for use_kw in (True, False):
        out = joint_heatmap_supplement_loss(
            sf_output, kf_output, gt, keypoint_weight,
            use_keypoint_weight=use_kw, divided_num_joints=True)
        out = jax.block_until_ready(out)
        ref = jax.block_until_ready(_reference(
            sf_output, kf_output, gt, keypoint_weight,
            use_keypoint_weight=use_kw, divided_num_joints=True))
        assert jnp.allclose(out, ref, rtol=1e-4, atol=1e-6), (use_kw, out, ref)

    # --- moderate shape exercising the multi-block (pipelined/parallel) path ---
    B2, N2, H2, W2 = 8, 16, 32, 64
    sf2 = jax.random.uniform(keys[4], (B2, N2, H2, W2), dtype=jnp.float32)
    kf2 = jax.random.uniform(keys[5], (B2, N2, H2, W2), dtype=jnp.float32)
    gt2 = jax.random.uniform(keys[6], (B2, N2, H2, W2), dtype=jnp.float32)
    kw2 = jax.random.uniform(keys[7], (B2, N2), dtype=jnp.float32)

    out2 = jax.block_until_ready(joint_heatmap_supplement_loss(sf2, kf2, gt2, kw2))
    ref2 = jax.block_until_ready(_reference(sf2, kf2, gt2, kw2))
    assert jnp.allclose(out2, ref2, rtol=1e-4, atol=1e-6), (out2, ref2)

    print("KERNEL_OK")
</pallas_src>

<mosaic_0001>
module attributes {stable_mosaic.version = 11 : i64} {
  func.func @_partials_kernel(%arg0: i32, %arg1: i32, %arg2: i32, %arg3: memref<2x4x256xf32, #tpu.memory_space<vmem>>, %arg4: memref<2x4x256xf32, #tpu.memory_space<vmem>>, %arg5: memref<2x4x256xf32, #tpu.memory_space<vmem>>, %arg6: memref<1x1x2x4xf32, #tpu.memory_space<vmem>>, %arg7: memref<1x1x2x4xf32, #tpu.memory_space<vmem>>, %arg8: memref<1x1x2x4xf32, #tpu.memory_space<vmem>>, %arg9: memref<1x1x2x4xf32, #tpu.memory_space<vmem>>) attributes {dimension_semantics = [#tpu.dimension_semantics<parallel>, #tpu.dimension_semantics<parallel>, #tpu.dimension_semantics<arbitrary>], iteration_bounds = array<i64: 1, 1, 1>, scalar_prefetch = 0 : i64, scratch_operands = 0 : i64, tpu.core_type = #tpu.core_type<tc>, window_params = [{transform_indices = @transform_0, window_bounds = array<i64: 2, 4, 256>}, {transform_indices = @transform_1, window_bounds = array<i64: 2, 4, 256>}, {transform_indices = @transform_2, window_bounds = array<i64: 2, 4, 256>}, {transform_indices = @transform_3, window_bounds = array<i64: 1, 1, 2, 4>}, {transform_indices = @transform_4, window_bounds = array<i64: 1, 1, 2, 4>}, {transform_indices = @transform_5, window_bounds = array<i64: 1, 1, 2, 4>}, {transform_indices = @transform_6, window_bounds = array<i64: 1, 1, 2, 4>}]} {
    %c0_i32 = arith.constant 0 : i32
    %0 = arith.cmpi eq, %arg2, %c0_i32 : i32
    %1 = arith.extui %0 : i1 to i32
    %c0_i32_0 = arith.constant 0 : i32
    %2 = arith.cmpi ne, %1, %c0_i32_0 : i32
    scf.if %2 {
      %cst_49 = arith.constant 0.000000e+00 : f32
      %40 = vector.broadcast %cst_49 : f32 to vector<1x1x2x4xf32>
      %c0_50 = arith.constant 0 : index
      %c0_51 = arith.constant 0 : index
      %c0_52 = arith.constant 0 : index
      %c0_53 = arith.constant 0 : index
      %41 = vector.load %arg6[%c0_50, %c0_51, %c0_52, %c0_53] : memref<1x1x2x4xf32, #tpu.memory_space<vmem>>, vector<1x1x2x4xf32>
      tpu.vector_store %arg6[%c0_50, %c0_51, %c0_52, %c0_53], %40 {strides = array<i32>} : memref<1x1x2x4xf32, #tpu.memory_space<vmem>>, vector<1x1x2x4xf32>,
      %cst_54 = arith.constant 0.000000e+00 : f32
      %42 = vector.broadcast %cst_54 : f32 to vector<1x1x2x4xf32>
      %c0_55 = arith.constant 0 : index
      %c0_56 = arith.constant 0 : index
      %c0_57 = arith.constant 0 : index
      %c0_58 = arith.constant 0 : index
      %43 = vector.load %arg7[%c0_55, %c0_56, %c0_57, %c0_58] : memref<1x1x2x4xf32, #tpu.memory_space<vmem>>, vector<1x1x2x4xf32>
      tpu.vector_store %arg7[%c0_55, %c0_56, %c0_57, %c0_58], %42 {strides = array<i32>} : memref<1x1x2x4xf32, #tpu.memory_space<vmem>>, vector<1x1x2x4xf32>,
      %cst_59 = arith.constant 0.000000e+00 : f32
      %44 = vector.broadcast %cst_59 : f32 to vector<1x1x2x4xf32>
      %c0_60 = arith.constant 0 : index
      %c0_61 = arith.constant 0 : index
      %c0_62 = arith.constant 0 : index
      %c0_63 = arith.constant 0 : index
      %45 = vector.load %arg8[%c0_60, %c0_61, %c0_62, %c0_63] : memref<1x1x2x4xf32, #tpu.memory_space<vmem>>, vector<1x1x2x4xf32>
      tpu.vector_store %arg8[%c0_60, %c0_61, %c0_62, %c0_63], %44 {strides = array<i32>} : memref<1x1x2x4xf32, #tpu.memory_space<vmem>>, vector<1x1x2x4xf32>,
      %cst_64 = arith.constant 0.000000e+00 : f32
      %46 = vector.broadcast %cst_64 : f32 to vector<1x1x2x4xf32>
      %c0_65 = arith.constant 0 : index
      %c0_66 = arith.constant 0 : index
      %c0_67 = arith.constant 0 : index
      %c0_68 = arith.constant 0 : index
      %47 = vector.load %arg9[%c0_65, %c0_66, %c0_67, %c0_68] : memref<1x1x2x4xf32, #tpu.memory_space<vmem>>, vector<1x1x2x4xf32>
      tpu.vector_store %arg9[%c0_65, %c0_66, %c0_67, %c0_68], %46 {strides = array<i32>} : memref<1x1x2x4xf32, #tpu.memory_space<vmem>>, vector<1x1x2x4xf32>,
    } else {
    }
    %c0 = arith.constant 0 : index
    %c0_1 = arith.constant 0 : index
    %c0_2 = arith.constant 0 : index
    %3 = vector.load %arg3[%c0, %c0_1, %c0_2] : memref<2x4x256xf32, #tpu.memory_space<vmem>>, vector<2x4x256xf32>
    %c0_3 = arith.constant 0 : index
    %c0_4 = arith.constant 0 : index
    %c0_5 = arith.constant 0 : index
    %4 = vector.load %arg5[%c0_3, %c0_4, %c0_5] : memref<2x4x256xf32, #tpu.memory_space<vmem>>, vector<2x4x256xf32>
    %c0_6 = arith.constant 0 : index
    %c0_7 = arith.constant 0 : index
    %c0_8 = arith.constant 0 : index
    %5 = vector.load %arg4[%c0_6, %c0_7, %c0_8] : memref<2x4x256xf32, #tpu.memory_space<vmem>>, vector<2x4x256xf32>
    %6 = arith.subf %3, %4 : vector<2x4x256xf32>
    %7 = arith.mulf %6, %6 : vector<2x4x256xf32>
    %cst = arith.constant 0.00999999977 : f32
    %8 = vector.broadcast %cst : f32 to vector<2x4x256xf32>
    %9 = arith.cmpf ogt, %4, %8 : vector<2x4x256xf32>
    %cst_9 = arith.constant 5.000000e-02 : f32
    %10 = vector.broadcast %cst_9 : f32 to vector<2x4x256xf32>
    %11 = arith.cmpf ole, %5, %10 : vector<2x4x256xf32>
    %cst_10 = arith.constant 0.000000e+00 : f32
    %12 = vector.broadcast %cst_10 : f32 to vector<2x4x256xf32>
    %13 = arith.select %9, %7, %12 : vector<2x4x256xi1>, vector<2x4x256xf32>
    %cst_11 = arith.constant 0.000000e+00 : f32
    %14 = vector.broadcast %cst_11 : f32 to vector<2x4x256xf32>
    %15 = arith.select %11, %13, %14 : vector<2x4x256xi1>, vector<2x4x256xf32>
    %16 = arith.extui %9 : vector<2x4x256xi1> to vector<2x4x256xi32>
    %17 = arith.sitofp %16 : vector<2x4x256xi32> to vector<2x4x256xf32>
    %cst_12 = arith.constant 0.000000e+00 : f32
    %18 = vector.broadcast %cst_12 : f32 to vector<2x4x256xf32>
    %19 = arith.select %11, %17, %18 : vector<2x4x256xi1>, vector<2x4x256xf32>
    %c0_13 = arith.constant 0 : index
    %c0_14 = arith.constant 0 : index
    %c0_15 = arith.constant 0 : index
    %c0_16 = arith.constant 0 : index
    %20 = vector.load %arg6[%c0_13, %c0_14, %c0_15, %c0_16] : memref<1x1x2x4xf32, #tpu.memory_space<vmem>>, vector<1x1x2x4xf32>
    %cst_17 = arith.constant dense<0.000000e+00> : vector<2x4xf32>
    %21 = vector.multi_reduction <add>, %13, %cst_17 [2] : vector<2x4x256xf32> to vector<2x4xf32>
    %22 = vector.shape_cast %21 : vector<2x4xf32> to vector<1x1x2x4xf32>
    %23 = arith.addf %20, %22 : vector<1x1x2x4xf32>
    %c0_18 = arith.constant 0 : index
    %c0_19 = arith.constant 0 : index
    %c0_20 = arith.constant 0 : index
    %c0_21 = arith.constant 0 : index
    %24 = vector.load %arg6[%c0_18, %c0_19, %c0_20, %c0_21] : memref<1x1x2x4xf32, #tpu.memory_space<vmem>>, vector<1x1x2x4xf32>
    tpu.vector_store %arg6[%c0_18, %c0_19, %c0_20, %c0_21], %23 {strides = array<i32>} : memref<1x1x2x4xf32, #tpu.memory_space<vmem>>, vector<1x1x2x4xf32>,
    %c0_22 = arith.constant 0 : index
    %c0_23 = arith.constant 0 : index
    %c0_24 = arith.constant 0 : index
    %c0_25 = arith.constant 0 : index
    %25 = vector.load %arg7[%c0_22, %c0_23, %c0_24, %c0_25] : memref<1x1x2x4xf32, #tpu.memory_space<vmem>>, vector<1x1x2x4xf32>
    %cst_26 = arith.constant dense<0.000000e+00> : vector<2x4xf32>
    %26 = vector.multi_reduction <add>, %15, %cst_26 [2] : vector<2x4x256xf32> to vector<2x4xf32>
    %27 = vector.shape_cast %26 : vector<2x4xf32> to vector<1x1x2x4xf32>
    %28 = arith.addf %25, %27 : vector<1x1x2x4xf32>
    %c0_27 = arith.constant 0 : index
    %c0_28 = arith.constant 0 : index
    %c0_29 = arith.constant 0 : index
    %c0_30 = arith.constant 0 : index
    %29 = vector.load %arg7[%c0_27, %c0_28, %c0_29, %c0_30] : memref<1x1x2x4xf32, #tpu.memory_space<vmem>>, vector<1x1x2x4xf32>
    tpu.vector_store %arg7[%c0_27, %c0_28, %c0_29, %c0_30], %28 {strides = array<i32>} : memref<1x1x2x4xf32, #tpu.memory_space<vmem>>, vector<1x1x2x4xf32>,
    %c0_31 = arith.constant 0 : index
    %c0_32 = arith.constant 0 : index
    %c0_33 = arith.constant 0 : index
    %c0_34 = arith.constant 0 : index
    %30 = vector.load %arg8[%c0_31, %c0_32, %c0_33, %c0_34] : memref<1x1x2x4xf32, #tpu.memory_space<vmem>>, vector<1x1x2x4xf32>
    %cst_35 = arith.constant dense<0.000000e+00> : vector<2x4xf32>
    %31 = vector.multi_reduction <add>, %17, %cst_35 [2] : vector<2x4x256xf32> to vector<2x4xf32>
    %32 = vector.shape_cast %31 : vector<2x4xf32> to vector<1x1x2x4xf32>
    %33 = arith.addf %30, %32 : vector<1x1x2x4xf32>
    %c0_36 = arith.constant 0 : index
    %c0_37 = arith.constant 0 : index
    %c0_38 = arith.constant 0 : index
    %c0_39 = arith.constant 0 : index
    %34 = vector.load %arg8[%c0_36, %c0_37, %c0_38, %c0_39] : memref<1x1x2x4xf32, #tpu.memory_space<vmem>>, vector<1x1x2x4xf32>
    tpu.vector_store %arg8[%c0_36, %c0_37, %c0_38, %c0_39], %33 {strides = array<i32>} : memref<1x1x2x4xf32, #tpu.memory_space<vmem>>, vector<1x1x2x4xf32>,
    %c0_40 = arith.constant 0 : index
    %c0_41 = arith.constant 0 : index
    %c0_42 = arith.constant 0 : index
    %c0_43 = arith.constant 0 : index
    %35 = vector.load %arg9[%c0_40, %c0_41, %c0_42, %c0_43] : memref<1x1x2x4xf32, #tpu.memory_space<vmem>>, vector<1x1x2x4xf32>
    %cst_44 = arith.constant dense<0.000000e+00> : vector<2x4xf32>
    %36 = vector.multi_reduction <add>, %19, %cst_44 [2] : vector<2x4x256xf32> to vector<2x4xf32>
    %37 = vector.shape_cast %36 : vector<2x4xf32> to vector<1x1x2x4xf32>
    %38 = arith.addf %35, %37 : vector<1x1x2x4xf32>
    %c0_45 = arith.constant 0 : index
    %c0_46 = arith.constant 0 : index
    %c0_47 = arith.constant 0 : index
    %c0_48 = arith.constant 0 : index
    %39 = vector.load %arg9[%c0_45, %c0_46, %c0_47, %c0_48] : memref<1x1x2x4xf32, #tpu.memory_space<vmem>>, vector<1x1x2x4xf32>
    tpu.vector_store %arg9[%c0_45, %c0_46, %c0_47, %c0_48], %38 {strides = array<i32>} : memref<1x1x2x4xf32, #tpu.memory_space<vmem>>, vector<1x1x2x4xf32>,
    return
  }
  func.func @transform_0(%arg0: i32, %arg1: i32, %arg2: i32) -> (i32, i32, i32) {
    %c0_i32 = arith.constant 0 : i32
    return %arg1, %arg0, %arg2 : i32, i32, i32
  }
  func.func @transform_1(%arg0: i32, %arg1: i32, %arg2: i32) -> (i32, i32, i32) {
    %c0_i32 = arith.constant 0 : i32
    return %arg1, %arg0, %arg2 : i32, i32, i32
  }
  func.func @transform_2(%arg0: i32, %arg1: i32, %arg2: i32) -> (i32, i32, i32) {
    %c0_i32 = arith.constant 0 : i32
    return %arg1, %arg0, %arg2 : i32, i32, i32
  }
  func.func @transform_3(%arg0: i32, %arg1: i32, %arg2: i32) -> (i32, i32, i32, i32) {
    %c0_i32 = arith.constant 0 : i32
    %c0_i32_0 = arith.constant 0 : i32
    %c0_i32_1 = arith.constant 0 : i32
    return %arg0, %arg1, %c0_i32, %c0_i32_0 : i32, i32, i32, i32
  }
  func.func @transform_4(%arg0: i32, %arg1: i32, %arg2: i32) -> (i32, i32, i32, i32) {
    %c0_i32 = arith.constant 0 : i32
    %c0_i32_0 = arith.constant 0 : i32
    %c0_i32_1 = arith.constant 0 : i32
    return %arg0, %arg1, %c0_i32, %c0_i32_0 : i32, i32, i32, i32
  }
  func.func @transform_5(%arg0: i32, %arg1: i32, %arg2: i32) -> (i32, i32, i32, i32) {
    %c0_i32 = arith.constant 0 : i32
    %c0_i32_0 = arith.constant 0 : i32
    %c0_i32_1 = arith.constant 0 : i32
    return %arg0, %arg1, %c0_i32, %c0_i32_0 : i32, i32, i32, i32
  }
  func.func @transform_6(%arg0: i32, %arg1: i32, %arg2: i32) -> (i32, i32, i32, i32) {
    %c0_i32 = arith.constant 0 : i32
    %c0_i32_0 = arith.constant 0 : i32
    %c0_i32_1 = arith.constant 0 : i32
    return %arg0, %arg1, %c0_i32, %c0_i32_0 : i32, i32, i32, i32
  }
}

</mosaic_0001>

<llo_original>
// kernel: tpu_custom_call.1
$region0: #{tpu_custom_call.1}
  #allocation0 [shape = 'u32[]', space=smem, size = 0x4, offset = 0x4, fixed_abs, tag = 'smem constant byte address 0x4 - core index']
  #allocation1 [shape = 'u32[72,128]{1,0:T(1,128)}', space=vmem, size = 0x9000, scoped, tag = 'internal scratch']
  %s0 = inlined_call_operand.hbm [shape: f32[2,4,256], index: 0, kind: input, shape index: {}]
  %s1 = inlined_call_operand.hbm [shape: f32[2,4,256], index: 1, kind: input, shape index: {}]
  %s2 = inlined_call_operand.hbm [shape: f32[2,4,256], index: 2, kind: input, shape index: {}]
  %s3 = inlined_call_operand.hbm [shape: f32[1,1,2,4], index: 3, kind: output, shape index: {0}]
  %s4 = inlined_call_operand.hbm [shape: f32[1,1,2,4], index: 4, kind: output, shape index: {1}]
  %s5 = inlined_call_operand.hbm [shape: f32[1,1,2,4], index: 5, kind: output, shape index: {2}]
  %s6 = inlined_call_operand.hbm [shape: f32[1,1,2,4], index: 6, kind: output, shape index: {3}]
  %7 = xla_tuple %s3, %s4, %s5, %s6
  %s8 = sld [smem:[#allocation0]]
  $region62: #{tpu_custom_call.1} parent=0
    _
  %s10 = ssub.s32 1, %s8
  %s11 = scalar_select 0, %s10, %s8
  $region1: #{tpu_custom_call.1} parent=0
    #allocation2 [shape = 'u8[8192]{0}', space=vmem, size = 0x2000, scoped, tag = 'input window, operand 0, single buffered']
    #allocation3 [shape = 's32[1]{0}', space=sflag, size = 0x4, scoped, tag = 'scoped memory for tpu_custom_call.1']
    #allocation4 [shape = 's32[1]{0}', space=sflag, size = 0x4, scoped, tag = 'scoped memory for tpu_custom_call.1']
    #allocation5 [shape = 'u8[8192]{0}', space=vmem, size = 0x2000, scoped, tag = 'input window, operand 1, single buffered']
    #allocation6 [shape = 's32[1]{0}', space=sflag, size = 0x4, scoped, tag = 'scoped memory for tpu_custom_call.1']
    #allocation7 [shape = 'u8[8192]{0}', space=vmem, size = 0x2000, scoped, tag = 'input window, operand 2, single buffered']
    #allocation8 [shape = 'u8[1024]{0}', space=vmem, size = 0x400, scoped, tag = 'output window, operand 0, single buffered']
    #allocation9 [shape = 'u8[1024]{0}', space=vmem, size = 0x400, scoped, tag = 'output window, operand 1, single buffered']
    #allocation10 [shape = 's32[1]{0}', space=sflag, size = 0x4, scoped, tag = 'scoped memory for tpu_custom_call.1']
    #allocation11 [shape = 'u8[1024]{0}', space=vmem, size = 0x400, scoped, tag = 'output window, operand 2, single buffered']
    #allocation12 [shape = 'u8[1024]{0}', space=vmem, size = 0x400, scoped, tag = 'output window, operand 3, single buffered']
    #allocation13 [shape = 's32[1]{0}', space=sflag, size = 0x4, scoped, tag = 'scoped memory for tpu_custom_call.1']
    %12 = vsyncpa [#allocation3], 0
    %13 = vsyncpa [#allocation6], 0
    %14 = vsyncpa [#allocation4], 0
    %15 = vsyncpa [#allocation10], 0
    %16 = vsyncpa [#allocation13], 0
    // Predicated region
    $region2: #{tpu_custom_call.1} parent=1 // pred_check
      _
    $region3: #{tpu_custom_call.1} parent=1 // pred_check_branch
      %18 = sbr.rel (0) target = $region5
    $region4: #{tpu_custom_call.1} parent=1 // pred_region
      %20 = vsyncadd [#allocation3], 0
      %s21 = sshll.u32 %s0, 4
      %s22 = int_to_ptr.hbm [resolvable:$true] %s21
      %s23 = sshll.u32 [#allocation2], 4
      %s24 = int_to_ptr.vmem [resolvable:$true] %s23
      %29 = dma.hbm_to_vmem [thread:$0]  %s22, 256, %s24, [#allocation3], 128, 128, 8
    $region5: #{tpu_custom_call.1} parent=1 // pred_fallthru
      _
    // Predicated region
    $region6: #{tpu_custom_call.1} parent=1 // pred_check
      _
    $region7: #{tpu_custom_call.1} parent=1 // pred_check_branch
      %31 = sbr.rel (0) target = $region9
    $region8: #{tpu_custom_call.1} parent=1 // pred_region
      %33 = vsyncadd [#allocation6], 0
      %s34 = sshll.u32 %s1, 4
      %s35 = int_to_ptr.hbm [resolvable:$true] %s34
      %s36 = sshll.u32 [#allocation5], 4
      %s37 = int_to_ptr.vmem [resolvable:$true] %s36
      %42 = dma.hbm_to_vmem [thread:$0]  %s35, 256, %s37, [#allocation6], 128, 128, 8
    $region9: #{tpu_custom_call.1} parent=1 // pred_fallthru
      _
    // Predicated region
    $region10: #{tpu_custom_call.1} parent=1 // pred_check
      _
    $region11: #{tpu_custom_call.1} parent=1 // pred_check_branch
      %44 = sbr.rel (0) target = $region13
    $region12: #{tpu_custom_call.1} parent=1 // pred_region
      %46 = vsyncadd [#allocation6], 0
      %s47 = sshll.u32 %s2, 4
      %s48 = int_to_ptr.hbm [resolvable:$true] %s47
      %s49 = sshll.u32 [#allocation7], 4
      %s50 = int_to_ptr.vmem [resolvable:$true] %s49
      %55 = dma.hbm_to_vmem [thread:$0]  %s48, 256, %s50, [#allocation6], 128, 128, 8
    $region13: #{tpu_custom_call.1} parent=1 // pred_fallthru
      _
    // Predicated region
    $region14: #{tpu_custom_call.1} parent=1 // pred_check
      _
    $region15: #{tpu_custom_call.1} parent=1 // pred_check_branch
      %57 = sbr.rel (0) target = $region17
    $region16: #{tpu_custom_call.1} parent=1 // pred_region
      %59 = dma.done [#allocation3], 256
    $region17: #{tpu_custom_call.1} parent=1 // pred_fallthru
      _
    // Predicated region
    $region18: #{tpu_custom_call.1} parent=1 // pred_check
      _
    $region19: #{tpu_custom_call.1} parent=1 // pred_check_branch
      %61 = sbr.rel (0) target = $region21
    $region20: #{tpu_custom_call.1} parent=1 // pred_region
      %63 = dma.done [#allocation6], 256
    $region21: #{tpu_custom_call.1} parent=1 // pred_fallthru
      _
    // Predicated region
    $region22: #{tpu_custom_call.1} parent=1 // pred_check
      _
    $region23: #{tpu_custom_call.1} parent=1 // pred_check_branch
      %65 = sbr.rel (0) target = $region25
    $region24: #{tpu_custom_call.1} parent=1 // pred_region
      %67 = dma.done [#allocation6], 256
    $region25: #{tpu_custom_call.1} parent=1 // pred_fallthru
      _
    %p68 = scmp.eq.s32.totalorder 0, 0
    // Predicated region
    $region26: #{tpu_custom_call.1} parent=1 // pred_check
      %p69 = pneg %p68
    $region27: #{tpu_custom_call.1} parent=1 // pred_check_branch
      %71 = sbr.rel (%p69) target = $region29
    $region28: #{tpu_custom_call.1} parent=1 // pred_region
      %vm72 = vcmask 25600
      %73 = vst.msk [vmem:[#allocation8] sm:$0x3] %vm72, 0.0
      %74 = vst.msk [vmem:[#allocation9] sm:$0x3] %vm72, 0.0
      %75 = vst.msk [vmem:[#allocation11] sm:$0x3] %vm72, 0.0
      %76 = vst.msk [vmem:[#allocation12] sm:$0x3] %vm72, 0.0
    $region29: #{tpu_custom_call.1} parent=1 // pred_fallthru
      _
    %v77 = vld [vmem:[#allocation2] sm:$0xff]
    %v78 = vld [vmem:[#allocation2 + $0x8] sm:$0xff]
    %v79 = vld [vmem:[#allocation7] sm:$0xff]
    %v80 = vld [vmem:[#allocation7 + $0x8] sm:$0xff]
    %v81 = vld [vmem:[#allocation5] sm:$0xff]
    %v82 = vld [vmem:[#allocation5 + $0x8] sm:$0xff]
    %v83 = vsub.f32 %v77, %v79
    %v84 = vsub.f32 %v78, %v80
    %v85 = vmul.f32 %v83, %v83
    %v86 = vmul.f32 %v84, %v84
    %vm87 = vcmp.gt.f32.partialorder %v79, 0.01
    %vm88 = vcmp.gt.f32.partialorder %v80, 0.01
    %vm89 = vcmp.le.f32.partialorder %v81, 0.05
    %vm90 = vcmp.le.f32.partialorder %v82, 0.05
    %v91 = vsel %vm87, %v85, 0.0
    %v92 = vsel %vm88, %v86, 0.0
    %v93 = vsel %vm89, %v91, 0.0
    %v94 = vsel %vm90, %v92, 0.0
    %v95 = vsel %vm87, 1, 0
    %v96 = vsel %vm88, 1, 0
    %v97 = vcvt.s32.f32 %v95
    %v98 = vcvt.s32.f32 %v96
    %v99 = vsel %vm89, %v97, 0.0
    %v100 = vsel %vm90, %v98, 0.0
    %v101 = vld [vmem:[#allocation8] sm:$0x3]
    %104 = vst [vmem:[#allocation1] ss:$2 sm:$0xff] %v91
    %v105 = vld.sshfl [vmem:[#allocation1] sm:$0xff pattern:$0x75316420]
    %v106 = vld.sshfl [vmem:[#allocation1 + $0x8] sm:$0xff pattern:$0x75316420]
    %s107 = scalar_lea.vmem [#allocation1], 16
    %108 = vst [vmem:[%s107] ss:$2 sm:$0xff] %v92
    %v109 = vld.sshfl [vmem:[#allocation1 + $0x10] sm:$0xff pattern:$0x75316420]
    %v110 = vld.sshfl [vmem:[#allocation1 + $0x18] sm:$0xff pattern:$0x75316420]
    %vm115 = vcmask 1043456
    %v116 = vsel %vm115, %v105, 0.0
    %v117 = vsel %vm115, %v106, 0.0
    %v118 = vadd.f32 %v116, %v117
    %119 = vadd.xlane.f32.xlu0 %v118
    %v120 = vpop.xlane.xlu0 %119
    %v121 = vsel %vm115, %v109, 0.0
    %v122 = vsel %vm115, %v110, 0.0
    %v123 = vadd.f32 %v121, %v122
    %124 = vadd.xlane.f32.xlu0 %v123
    %v125 = vpop.xlane.xlu0 %124
    %v128 = vlaneseq
    %v129 = vand.u32 %v128, 127
    %v130 = vperm.slane %v120, %v129
    %v131 = vperm.slane %v125, %v129
    %vm132 = vcmask 1041409
    %v133 = vsel %vm132, %v131, %v130
    %v135 = vadd.f32 %v101, %v133
    %vm136 = vcmask 25600
    %137 = vst.msk [vmem:[#allocation8] sm:$0x3] %vm136, %v135
    %v138 = vld [vmem:[#allocation9] sm:$0x3]
    %141 = vst [vmem:[#allocation1] ss:$2 sm:$0xff] %v93
    %v142 = vld.sshfl [vmem:[#allocation1] sm:$0xff pattern:$0x75316420]
    %v143 = vld.sshfl [vmem:[#allocation1 + $0x8] sm:$0xff pattern:$0x75316420]
    %s144 = scalar_lea.vmem [#allocation1], 16
    %145 = vst [vmem:[%s144] ss:$2 sm:$0xff] %v94
    %v146 = vld.sshfl [vmem:[#allocation1 + $0x10] sm:$0xff pattern:$0x75316420]
    %v147 = vld.sshfl [vmem:[#allocation1 + $0x18] sm:$0xff pattern:$0x75316420]
    %v152 = vsel %vm115, %v142, 0.0
    %v153 = vsel %vm115, %v143, 0.0
    %v154 = vadd.f32 %v152, %v153
    %155 = vadd.xlane.f32.xlu0 %v154
    %v156 = vpop.xlane.xlu0 %155
    %v157 = vsel %vm115, %v146, 0.0
    %v158 = vsel %vm115, %v147, 0.0
    %v159 = vadd.f32 %v157, %v158
    %160 = vadd.xlane.f32.xlu0 %v159
    %v161 = vpop.xlane.xlu0 %160
    %v164 = vperm.slane %v156, %v129
    %v165 = vperm.slane %v161, %v129
    %v166 = vsel %vm132, %v165, %v164
    %v168 = vadd.f32 %v138, %v166
    %169 = vst.msk [vmem:[#allocation9] sm:$0x3] %vm136, %v168
    %v170 = vld [vmem:[#allocation11] sm:$0x3]
    %173 = vst [vmem:[#allocation1] ss:$2 sm:$0xff] %v97
    %v174 = vld.sshfl [vmem:[#allocation1] sm:$0xff pattern:$0x75316420]
    %v175 = vld.sshfl [vmem:[#allocation1 + $0x8] sm:$0xff pattern:$0x75316420]
    %s176 = scalar_lea.vmem [#allocation1], 16
    %177 = vst [vmem:[%s176] ss:$2 sm:$0xff] %v98
    %v178 = vld.sshfl [vmem:[#allocation1 + $0x10] sm:$0xff pattern:$0x75316420]
    %v179 = vld.sshfl [vmem:[#allocation1 + $0x18] sm:$0xff pattern:$0x75316420]
    %v184 = vsel %vm115, %v174, 0.0
    %v185 = vsel %vm115, %v175, 0.0
    %v186 = vadd.f32 %v184, %v185
    %187 = vadd.xlane.f32.xlu0 %v186
    %v188 = vpop.xlane.xlu0 %187
    %v189 = vsel %vm115, %v178, 0.0
    %v190 = vsel %vm115, %v179, 0.0
    %v191 = vadd.f32 %v189, %v190
    %192 = vadd.xlane.f32.xlu0 %v191
    %v193 = vpop.xlane.xlu0 %192
    %v196 = vperm.slane %v188, %v129
    %v197 = vperm.slane %v193, %v129
    %v198 = vsel %vm132, %v197, %v196
    %v200 = vadd.f32 %v170, %v198
    %201 = vst.msk [vmem:[#allocation11] sm:$0x3] %vm136, %v200
    %v202 = vld [vmem:[#allocation12] sm:$0x3]
    %205 = vst [vmem:[#allocation1] ss:$2 sm:$0xff] %v99
    %v206 = vld.sshfl [vmem:[#allocation1] sm:$0xff pattern:$0x75316420]
    %v207 = vld.sshfl [vmem:[#allocation1 + $0x8] sm:$0xff pattern:$0x75316420]
    %s208 = scalar_lea.vmem [#allocation1], 16
    %209 = vst [vmem:[%s208] ss:$2 sm:$0xff] %v100
    %v210 = vld.sshfl [vmem:[#allocation1 + $0x10] sm:$0xff pattern:$0x75316420]
    %v211 = vld.sshfl [vmem:[#allocation1 + $0x18] sm:$0xff pattern:$0x75316420]
    %v216 = vsel %vm115, %v206, 0.0
    %v217 = vsel %vm115, %v207, 0.0
    %v218 = vadd.f32 %v216, %v217
    %219 = vadd.xlane.f32.xlu0 %v218
    %v220 = vpop.xlane.xlu0 %219
    %v221 = vsel %vm115, %v210, 0.0
    %v222 = vsel %vm115, %v211, 0.0
    %v223 = vadd.f32 %v221, %v222
    %224 = vadd.xlane.f32.xlu0 %v223
    %v225 = vpop.xlane.xlu0 %224
    %v228 = vperm.slane %v220, %v129
    %v229 = vperm.slane %v225, %v129
    %v230 = vsel %vm132, %v229, %v228
    %v232 = vadd.f32 %v202, %v230
    %233 = vst.msk [vmem:[#allocation12] sm:$0x3] %vm136, %v232
    // Predicated region
    $region30: #{tpu_custom_call.1} parent=1 // pred_check
      _
    $region31: #{tpu_custom_call.1} parent=1 // pred_check_branch
      %235 = sbr.rel (0) target = $region33
    $region32: #{tpu_custom_call.1} parent=1 // pred_region
      %237 = vsyncadd [#allocation4], 0
      %s239 = sshll.u32 [#allocation8], 4
      %s240 = int_to_ptr.vmem [resolvable:$true] %s239
      %s241 = sshll.u32 %s3, 4
      %s242 = int_to_ptr.hbm [resolvable:$true] %s241
      %244 = dma.vmem_to_hbm [thread:$0]  %s240, 32, %s242, [#allocation4]
    $region33: #{tpu_custom_call.1} parent=1 // pred_fallthru
      _
    // Predicated region
    $region34: #{tpu_custom_call.1} parent=1 // pred_check
      _
    $region35: #{tpu_custom_call.1} parent=1 // pred_check_branch
      %246 = sbr.rel (0) target = $region37
    $region36: #{tpu_custom_call.1} parent=1 // pred_region
      %248 = vsyncadd [#allocation10], 0
      %s250 = sshll.u32 [#allocation9], 4
      %s251 = int_to_ptr.vmem [resolvable:$true] %s250
      %s252 = sshll.u32 %s4, 4
      %s253 = int_to_ptr.hbm [resolvable:$true] %s252
      %255 = dma.vmem_to_hbm [thread:$0]  %s251, 32, %s253, [#allocation10]
    $region37: #{tpu_custom_call.1} parent=1 // pred_fallthru
      _
    // Predicated region
    $region38: #{tpu_custom_call.1} parent=1 // pred_check
      _
    $region39: #{tpu_custom_call.1} parent=1 // pred_check_branch
      %257 = sbr.rel (0) target = $region41
    $region40: #{tpu_custom_call.1} parent=1 // pred_region
      %259 = vsyncadd [#allocation10], 0
      %s261 = sshll.u32 [#allocation11], 4
      %s262 = int_to_ptr.vmem [resolvable:$true] %s261
      %s263 = sshll.u32 %s5, 4
      %s264 = int_to_ptr.hbm [resolvable:$true] %s263
      %266 = dma.vmem_to_hbm [thread:$0]  %s262, 32, %s264, [#allocation10]
    $region41: #{tpu_custom_call.1} parent=1 // pred_fallthru
      _
    // Predicated region
    $region42: #{tpu_custom_call.1} parent=1 // pred_check
      _
    $region43: #{tpu_custom_call.1} parent=1 // pred_check_branch
      %268 = sbr.rel (0) target = $region45
    $region44: #{tpu_custom_call.1} parent=1 // pred_region
      %270 = vsyncadd [#allocation13], 0
      %s272 = sshll.u32 [#allocation12], 4
      %s273 = int_to_ptr.vmem [resolvable:$true] %s272
      %s274 = sshll.u32 %s6, 4
      %s275 = int_to_ptr.hbm [resolvable:$true] %s274
      %277 = dma.vmem_to_hbm [thread:$0]  %s273, 32, %s275, [#allocation13]
    $region45: #{tpu_custom_call.1} parent=1 // pred_fallthru
      _
    // Predicated region
    $region46: #{tpu_custom_call.1} parent=1 // pred_check
      _
    $region47: #{tpu_custom_call.1} parent=1 // pred_check_branch
      %279 = sbr.rel (0) target = $region49
    $region48: #{tpu_custom_call.1} parent=1 // pred_region
      %281 = dma.done [#allocation4], 32
    $region49: #{tpu_custom_call.1} parent=1 // pred_fallthru
      _
    // Predicated region
    $region50: #{tpu_custom_call.1} parent=1 // pred_check
      _
    $region51: #{tpu_custom_call.1} parent=1 // pred_check_branch
      %283 = sbr.rel (0) target = $region53
    $region52: #{tpu_custom_call.1} parent=1 // pred_region
      %285 = dma.done [#allocation10], 32
    $region53: #{tpu_custom_call.1} parent=1 // pred_fallthru
      _
    // Predicated region
    $region54: #{tpu_custom_call.1} parent=1 // pred_check
      _
    $region55: #{tpu_custom_call.1} parent=1 // pred_check_branch
      %287 = sbr.rel (0) target = $region57
    $region56: #{tpu_custom_call.1} parent=1 // pred_region
      %289 = dma.done [#allocation10], 32
    $region57: #{tpu_custom_call.1} parent=1 // pred_fallthru
      _
    // Predicated region
    $region58: #{tpu_custom_call.1} parent=1 // pred_check
      _
    $region59: #{tpu_custom_call.1} parent=1 // pred_check_branch
      %291 = sbr.rel (0) target = $region61
    $region60: #{tpu_custom_call.1} parent=1 // pred_region
      %293 = dma.done [#allocation13], 32
    $region61: #{tpu_custom_call.1} parent=1 // pred_fallthru
      _
    %294 = vsyncpa [#allocation3], 1
    %295 = vsyncpa [#allocation6], 1
    %296 = vsyncpa [#allocation4], 1
    %297 = vsyncpa [#allocation10], 1
    %298 = vsyncpa [#allocation13], 1

</llo_original>
